<compile_context>
chip_gen: v6e
topology: v6e:2x2x1
jax: 0.10.0
libtpu: 0.0.40
codegen_flags: <defaults>
</compile_context>

<pallas_src>
import functools

import jax
import jax.numpy as jnp
from jax.experimental import pallas as pl
from jax.experimental.pallas import tpu as pltpu


def sablock_kernel(x_ref, wq_ref, wk_ref, wv_ref, wo_ref, bo_ref, out_ref,
                   acc_ref, *, bt, seq_len):
    """One (batch-tile, head) grid step of multi-head self-attention."""
    h = pl.program_id(1)

    @pl.when(h == 0)
    def _init():
        acc_ref[...] = jnp.zeros_like(acc_ref)

    # (bt, L, E) -> (bt*L, E): leading-dim merge (layout preserving, L % 8 == 0),
    # cast to bf16 so every matmul below runs at native MXU rate.
    x2 = x_ref[...].reshape(bt * seq_len, -1).astype(jnp.bfloat16)

    # Per-head projections; the head split was done by the BlockSpec DMA
    # (weight blocks are (E, dh) / (dh, E)), so no lane slicing in VMEM.
    # Softmax scale is already folded into Wq in the wrapper.
    q = jnp.dot(x2, wq_ref[0], preferred_element_type=jnp.float32)   # (bt*L, dh)
    k = jnp.dot(x2, wk_ref[0], preferred_element_type=jnp.float32)
    v = jnp.dot(x2, wv_ref[0], preferred_element_type=jnp.float32)

    dh = q.shape[-1]
    q3 = q.reshape(bt, seq_len, dh).astype(jnp.bfloat16)
    k3 = k.reshape(bt, seq_len, dh).astype(jnp.bfloat16)
    v3 = v.reshape(bt, seq_len, dh).astype(jnp.bfloat16)

    # Batched (over the batch tile) q.k^T -- no explicit transpose of k.
    s = jnp.einsum('bqd,bkd->bqk', q3, k3,
                   preferred_element_type=jnp.float32)               # (bt, L, L)
    s = s - jnp.max(s, axis=-1, keepdims=True)
    e = jnp.exp(s)                                                   # f32 exp (v5e-safe)
    att = (e * pl.reciprocal(jnp.sum(e, axis=-1, keepdims=True),
                             approx=True)).astype(jnp.bfloat16)

    ctx = jnp.einsum('bqk,bkd->bqd', att, v3,
                     preferred_element_type=jnp.float32)             # (bt, L, dh)
    ctx2 = ctx.reshape(bt * seq_len, dh).astype(jnp.bfloat16)

    # Out-projection distributed over heads: out = sum_h ctx_h @ Wo^T[h].
    acc_ref[...] += jnp.dot(ctx2, wo_ref[0],
                            preferred_element_type=jnp.float32)      # (bt*L, E)

    @pl.when(h == pl.num_programs(1) - 1)
    def _finalize():
        out = acc_ref[...] + bo_ref[...]                             # (bt*L, E)
        out_ref[...] = out.reshape(bt, seq_len, -1).astype(out_ref.dtype)


def sablock_forward(x, params, *, num_heads, dim_head, batch_tile=None):
    B, L, E = x.shape
    inner = num_heads * dim_head
    qkv_w, out_w, out_b = params
    scale = float(dim_head) ** -0.5

    bt = B if batch_tile is None else batch_tile
    assert B % bt == 0, "batch tile must divide batch"
    assert L % 8 == 0, "sequence length must be a multiple of the sublane (8)"

    # Head-major weight layout prepared once in the wrapper (bf16 for the MXU).
    # Wq/Wk/Wv: (H, E, dh);  Wo^T: (H, dh, E).  Scale folded into Wq.
    def split_heads(w_rows):                       # (inner, E) -> (H, E, dh)
        return jnp.transpose(w_rows.reshape(num_heads, dim_head, E), (0, 2, 1))

    wq = (split_heads(qkv_w[0 * inner:1 * inner, :]) * scale).astype(jnp.bfloat16)
    wk = split_heads(qkv_w[1 * inner:2 * inner, :]).astype(jnp.bfloat16)
    wv = split_heads(qkv_w[2 * inner:3 * inner, :]).astype(jnp.bfloat16)
    wo = out_w.T.reshape(num_heads, dim_head, E).astype(jnp.bfloat16)
    bo = out_b.reshape(1, E).astype(jnp.float32)

    kernel = functools.partial(sablock_kernel, bt=bt, seq_len=L)

    return pl.pallas_call(
        kernel,
        out_shape=jax.ShapeDtypeStruct((B, L, E), x.dtype),
        grid_spec=pltpu.PrefetchScalarGridSpec(
            num_scalar_prefetch=0,
            grid=(B // bt, num_heads),             # head (reduction) axis last
            in_specs=[
                pl.BlockSpec((bt, L, E), lambda b, h: (b, 0, 0)),          # x (resident per b)
                pl.BlockSpec((1, E, dim_head), lambda b, h: (h, 0, 0)),    # Wq head block
                pl.BlockSpec((1, E, dim_head), lambda b, h: (h, 0, 0)),    # Wk head block
                pl.BlockSpec((1, E, dim_head), lambda b, h: (h, 0, 0)),    # Wv head block
                pl.BlockSpec((1, dim_head, E), lambda b, h: (h, 0, 0)),    # Wo^T head block
                pl.BlockSpec((1, E), lambda b, h: (0, 0)),                 # out_proj bias
            ],
            out_specs=pl.BlockSpec((bt, L, E), lambda b, h: (b, 0, 0)),
            scratch_shapes=[pltpu.VMEM((bt * L, E), jnp.float32)],         # f32 accumulator
        ),
        compiler_params=pltpu.CompilerParams(
            dimension_semantics=("parallel", "arbitrary"),
            vmem_limit_bytes=32 * 1024 * 1024,
        ),
    )(x, wq, wk, wv, wo, bo)


def sablock_reference(x, params, *, num_heads, dim_head):
    """Pure-JAX (f32) reference reproducing the PyTorch SABlock forward."""
    qkv_w, out_w, out_b = params
    B, L, E = x.shape
    inner = num_heads * dim_head
    scale = float(dim_head) ** -0.5
    qkv = jnp.einsum('ble,fe->blf', x, qkv_w)                    # (B, L, 3*inner)
    qkv = qkv.reshape(B, L, 3, num_heads, dim_head)
    qkv = jnp.transpose(qkv, (2, 0, 3, 1, 4))                    # (3, B, H, L, dh)
    q, k, v = qkv[0], qkv[1], qkv[2]
    att = jax.nn.softmax(jnp.einsum('bhxd,bhyd->bhxy', q, k) * scale, axis=-1)
    o = jnp.einsum('bhxy,bhyd->bhxd', att, v)                    # (B, H, L, dh)
    o = jnp.transpose(o, (0, 2, 1, 3)).reshape(B, L, inner)      # b l (h d)
    # dropout_rate = 0.0 -> dropouts are identity
    return jnp.einsum('blf,ef->ble', o, out_w) + out_b[None, None, :]


if __name__ == "__main__":
    B, L, E = 2, 16, 32            # batch, sequence, hidden_size
    num_heads = 4
    dim_head = E // num_heads      # 8 (module default: hidden_size // num_heads)
    inner = num_heads * dim_head

    key = jax.random.PRNGKey(0)
    kx, kw1, kw2, kb = jax.random.split(key, 4)
    x = jax.random.normal(kx, (B, L, E), jnp.float32)
    qkv_w = jax.random.normal(kw1, (3 * inner, E), jnp.float32) * (E ** -0.5)
    out_w = jax.random.normal(kw2, (E, inner), jnp.float32) * (inner ** -0.5)
    out_b = jax.random.normal(kb, (E,), jnp.float32) * 0.1
    params = (qkv_w, out_w, out_b)

    out = sablock_forward(x, params, num_heads=num_heads, dim_head=dim_head)
    out = jax.block_until_ready(out)

    ref = sablock_reference(x, params, num_heads=num_heads, dim_head=dim_head)
    assert out.shape == (B, L, E)
    # Tolerance covers bf16 matmul inputs (f32 accumulation) and the approximate
    # EUP reciprocal in the softmax.
    max_err = float(jnp.max(jnp.abs(out - ref)))
    assert jnp.allclose(out, ref, atol=5e-2, rtol=5e-2), (
        f"mismatch vs reference, max abs err = {max_err}")
    print("KERNEL_OK")
</pallas_src>

<mosaic_0001>
module attributes {stable_mosaic.version = 11 : i64} {
  func.func @sablock_kernel(%arg0: i32, %arg1: i32, %arg2: memref<2x16x32xf32, #tpu.memory_space<vmem>>, %arg3: memref<1x32x8xbf16, #tpu.memory_space<vmem>>, %arg4: memref<1x32x8xbf16, #tpu.memory_space<vmem>>, %arg5: memref<1x32x8xbf16, #tpu.memory_space<vmem>>, %arg6: memref<1x8x32xbf16, #tpu.memory_space<vmem>>, %arg7: memref<1x32xf32, #tpu.memory_space<vmem>>, %arg8: memref<2x16x32xf32, #tpu.memory_space<vmem>>, %arg9: memref<32x32xf32, #tpu.memory_space<vmem>>) attributes {dimension_semantics = [#tpu.dimension_semantics<parallel>, #tpu.dimension_semantics<arbitrary>], iteration_bounds = array<i64: 1, 4>, scalar_prefetch = 0 : i64, scratch_operands = 1 : i64, tpu.core_type = #tpu.core_type<tc>, window_params = [{transform_indices = @transform_0, window_bounds = array<i64: 2, 16, 32>}, {transform_indices = @transform_1, window_bounds = array<i64: 1, 32, 8>}, {transform_indices = @transform_2, window_bounds = array<i64: 1, 32, 8>}, {transform_indices = @transform_3, window_bounds = array<i64: 1, 32, 8>}, {transform_indices = @transform_4, window_bounds = array<i64: 1, 8, 32>}, {pipeline_mode = #tpu.pipeline_mode<synchronous>, transform_indices = @transform_5, window_bounds = array<i64: 1, 32>}, {transform_indices = @transform_6, window_bounds = array<i64: 2, 16, 32>}]} {
    %c0_i32 = arith.constant 0 : i32
    %0 = arith.cmpi eq, %arg1, %c0_i32 : i32
    %1 = arith.extui %0 : i1 to i32
    %c0_i32_0 = arith.constant 0 : i32
    %2 = arith.cmpi ne, %1, %c0_i32_0 : i32
    scf.if %2 {
      %cst_27 = arith.constant 0.000000e+00 : f32
      %45 = vector.broadcast %cst_27 : f32 to vector<32x32xf32>
      %c0_28 = arith.constant 0 : index
      %c0_29 = arith.constant 0 : index
      %46 = vector.load %arg9[%c0_28, %c0_29] : memref<32x32xf32, #tpu.memory_space<vmem>>, vector<32x32xf32>
      tpu.vector_store %arg9[%c0_28, %c0_29], %45 {strides = array<i32>} : memref<32x32xf32, #tpu.memory_space<vmem>>, vector<32x32xf32>,
    } else {
    }
    %c0 = arith.constant 0 : index
    %c0_1 = arith.constant 0 : index
    %c0_2 = arith.constant 0 : index
    %3 = vector.load %arg2[%c0, %c0_1, %c0_2] : memref<2x16x32xf32, #tpu.memory_space<vmem>>, vector<2x16x32xf32>
    %4 = vector.shape_cast %3 : vector<2x16x32xf32> to vector<32x32xf32>
    %5 = arith.truncf %4 : vector<32x32xf32> to vector<32x32xbf16>
    %c0_3 = arith.constant 0 : index
    %c0_4 = arith.constant 0 : index
    %c0_5 = arith.constant 0 : index
    %6 = vector.load %arg3[%c0_3, %c0_4, %c0_5] : memref<1x32x8xbf16, #tpu.memory_space<vmem>>, vector<1x32x8xbf16>
    %7 = vector.shape_cast %6 : vector<1x32x8xbf16> to vector<32x8xbf16>
    %cst = arith.constant dense<0.000000e+00> : vector<32x8xf32>
    %8 = tpu.matmul %5, %7, %cst {dimension_numbers = #tpu.dot_dimension_numbers<[1], [0], [0], [1], [0, 0, 1, 1], [], []>} : vector<32x32xbf16>, vector<32x8xbf16>, vector<32x8xf32> -> vector<32x8xf32>
    %c0_6 = arith.constant 0 : index
    %c0_7 = arith.constant 0 : index
    %c0_8 = arith.constant 0 : index
    %9 = vector.load %arg4[%c0_6, %c0_7, %c0_8] : memref<1x32x8xbf16, #tpu.memory_space<vmem>>, vector<1x32x8xbf16>
    %10 = vector.shape_cast %9 : vector<1x32x8xbf16> to vector<32x8xbf16>
    %cst_9 = arith.constant dense<0.000000e+00> : vector<32x8xf32>
    %11 = tpu.matmul %5, %10, %cst_9 {dimension_numbers = #tpu.dot_dimension_numbers<[1], [0], [0], [1], [0, 0, 1, 1], [], []>} : vector<32x32xbf16>, vector<32x8xbf16>, vector<32x8xf32> -> vector<32x8xf32>
    %c0_10 = arith.constant 0 : index
    %c0_11 = arith.constant 0 : index
    %c0_12 = arith.constant 0 : index
    %12 = vector.load %arg5[%c0_10, %c0_11, %c0_12] : memref<1x32x8xbf16, #tpu.memory_space<vmem>>, vector<1x32x8xbf16>
    %13 = vector.shape_cast %12 : vector<1x32x8xbf16> to vector<32x8xbf16>
    %cst_13 = arith.constant dense<0.000000e+00> : vector<32x8xf32>
    %14 = tpu.matmul %5, %13, %cst_13 {dimension_numbers = #tpu.dot_dimension_numbers<[1], [0], [0], [1], [0, 0, 1, 1], [], []>} : vector<32x32xbf16>, vector<32x8xbf16>, vector<32x8xf32> -> vector<32x8xf32>
    %15 = vector.shape_cast %8 : vector<32x8xf32> to vector<2x16x8xf32>
    %16 = arith.truncf %15 : vector<2x16x8xf32> to vector<2x16x8xbf16>
    %17 = vector.shape_cast %11 : vector<32x8xf32> to vector<2x16x8xf32>
    %18 = arith.truncf %17 : vector<2x16x8xf32> to vector<2x16x8xbf16>
    %19 = vector.shape_cast %14 : vector<32x8xf32> to vector<2x16x8xf32>
    %20 = arith.truncf %19 : vector<2x16x8xf32> to vector<2x16x8xbf16>
    "tpu.trace_start"() <{level = 10 : i32, message = "bqd,bkd->bqk"}> : () -> ()
    %cst_14 = arith.constant dense<0.000000e+00> : vector<2x16x16xf32>
    %21 = tpu.matmul %16, %18, %cst_14 {dimension_numbers = #tpu.dot_dimension_numbers<[2], [2], [1], [1], [0, 0, 0, 1, 1, 1], [0], [0]>} : vector<2x16x8xbf16>, vector<2x16x8xbf16>, vector<2x16x16xf32> -> vector<2x16x16xf32>
    "tpu.trace_stop"() : () -> ()
    %cst_15 = arith.constant dense<0xFF800000> : vector<2x16xf32>
    %22 = vector.multi_reduction <maximumf>, %21, %cst_15 [2] : vector<2x16x16xf32> to vector<2x16xf32>
    %23 = vector.shape_cast %22 : vector<2x16xf32> to vector<2x16x1xf32>
    %24 = vector.broadcast %23 : vector<2x16x1xf32> to vector<2x16x16xf32>
    %25 = arith.subf %21, %24 : vector<2x16x16xf32>
    %26 = math.exp %25 : vector<2x16x16xf32>
    %cst_16 = arith.constant dense<0.000000e+00> : vector<2x16xf32>
    %27 = vector.multi_reduction <add>, %26, %cst_16 [2] : vector<2x16x16xf32> to vector<2x16xf32>
    %28 = vector.shape_cast %27 : vector<2x16xf32> to vector<2x16x1xf32>
    %29 = tpu.reciprocal %28 {approx = true} : vector<2x16x1xf32> -> vector<2x16x1xf32>
    %30 = vector.broadcast %29 : vector<2x16x1xf32> to vector<2x16x16xf32>
    %31 = arith.mulf %26, %30 : vector<2x16x16xf32>
    %32 = arith.truncf %31 : vector<2x16x16xf32> to vector<2x16x16xbf16>
    "tpu.trace_start"() <{level = 10 : i32, message = "bqk,bkd->bqd"}> : () -> ()
    %cst_17 = arith.constant dense<0.000000e+00> : vector<2x16x8xf32>
    %33 = tpu.matmul %32, %20, %cst_17 {dimension_numbers = #tpu.dot_dimension_numbers<[2], [1], [1], [2], [0, 0, 0, 1, 1, 2], [0], [0]>} : vector<2x16x16xbf16>, vector<2x16x8xbf16>, vector<2x16x8xf32> -> vector<2x16x8xf32>
    "tpu.trace_stop"() : () -> ()
    %34 = vector.shape_cast %33 : vector<2x16x8xf32> to vector<32x8xf32>
    %35 = arith.truncf %34 : vector<32x8xf32> to vector<32x8xbf16>
    %c0_18 = arith.constant 0 : index
    %c0_19 = arith.constant 0 : index
    %36 = vector.load %arg9[%c0_18, %c0_19] : memref<32x32xf32, #tpu.memory_space<vmem>>, vector<32x32xf32>
    %c0_20 = arith.constant 0 : index
    %c0_21 = arith.constant 0 : index
    %c0_22 = arith.constant 0 : index
    %37 = vector.load %arg6[%c0_20, %c0_21, %c0_22] : memref<1x8x32xbf16, #tpu.memory_space<vmem>>, vector<1x8x32xbf16>
    %38 = vector.shape_cast %37 : vector<1x8x32xbf16> to vector<8x32xbf16>
    %cst_23 = arith.constant dense<0.000000e+00> : vector<32x32xf32>
    %39 = tpu.matmul %35, %38, %cst_23 {dimension_numbers = #tpu.dot_dimension_numbers<[1], [0], [0], [1], [0, 0, 1, 1], [], []>} : vector<32x8xbf16>, vector<8x32xbf16>, vector<32x32xf32> -> vector<32x32xf32>
    %40 = arith.addf %36, %39 : vector<32x32xf32>
    %c0_24 = arith.constant 0 : index
    %c0_25 = arith.constant 0 : index
    %41 = vector.load %arg9[%c0_24, %c0_25] : memref<32x32xf32, #tpu.memory_space<vmem>>, vector<32x32xf32>
    tpu.vector_store %arg9[%c0_24, %c0_25], %40 {strides = array<i32>} : memref<32x32xf32, #tpu.memory_space<vmem>>, vector<32x32xf32>,
    %c3_i32 = arith.constant 3 : i32
    %42 = arith.cmpi eq, %arg1, %c3_i32 : i32
    %43 = arith.extui %42 : i1 to i32
    %c0_i32_26 = arith.constant 0 : i32
    %44 = arith.cmpi ne, %43, %c0_i32_26 : i32
    scf.if %44 {
      %c0_27 = arith.constant 0 : index
      %c0_28 = arith.constant 0 : index
      %45 = vector.load %arg9[%c0_27, %c0_28] : memref<32x32xf32, #tpu.memory_space<vmem>>, vector<32x32xf32>
      %c0_29 = arith.constant 0 : index
      %c0_30 = arith.constant 0 : index
      %46 = vector.load %arg7[%c0_29, %c0_30] : memref<1x32xf32, #tpu.memory_space<vmem>>, vector<1x32xf32>
      %47 = vector.broadcast %46 : vector<1x32xf32> to vector<32x32xf32>
      %48 = arith.addf %45, %47 : vector<32x32xf32>
      %49 = vector.shape_cast %48 : vector<32x32xf32> to vector<2x16x32xf32>
      %c0_31 = arith.constant 0 : index
      %c0_32 = arith.constant 0 : index
      %c0_33 = arith.constant 0 : index
      %50 = vector.load %arg8[%c0_31, %c0_32, %c0_33] : memref<2x16x32xf32, #tpu.memory_space<vmem>>, vector<2x16x32xf32>
      tpu.vector_store %arg8[%c0_31, %c0_32, %c0_33], %49 {strides = array<i32>} : memref<2x16x32xf32, #tpu.memory_space<vmem>>, vector<2x16x32xf32>,
    } else {
    }
    return
  }
  func.func @transform_0(%arg0: i32, %arg1: i32) -> (i32, i32, i32) {
    %c0_i32 = arith.constant 0 : i32
    %c0_i32_0 = arith.constant 0 : i32
    %c0_i32_1 = arith.constant 0 : i32
    return %arg0, %c0_i32, %c0_i32_0 : i32, i32, i32
  }
  func.func @transform_1(%arg0: i32, %arg1: i32) -> (i32, i32, i32) {
    %c0_i32 = arith.constant 0 : i32
    %c0_i32_0 = arith.constant 0 : i32
    %c0_i32_1 = arith.constant 0 : i32
    return %arg1, %c0_i32, %c0_i32_0 : i32, i32, i32
  }
  func.func @transform_2(%arg0: i32, %arg1: i32) -> (i32, i32, i32) {
    %c0_i32 = arith.constant 0 : i32
    %c0_i32_0 = arith.constant 0 : i32
    %c0_i32_1 = arith.constant 0 : i32
    return %arg1, %c0_i32, %c0_i32_0 : i32, i32, i32
  }
  func.func @transform_3(%arg0: i32, %arg1: i32) -> (i32, i32, i32) {
    %c0_i32 = arith.constant 0 : i32
    %c0_i32_0 = arith.constant 0 : i32
    %c0_i32_1 = arith.constant 0 : i32
    return %arg1, %c0_i32, %c0_i32_0 : i32, i32, i32
  }
  func.func @transform_4(%arg0: i32, %arg1: i32) -> (i32, i32, i32) {
    %c0_i32 = arith.constant 0 : i32
    %c0_i32_0 = arith.constant 0 : i32
    %c0_i32_1 = arith.constant 0 : i32
    return %arg1, %c0_i32, %c0_i32_0 : i32, i32, i32
  }
  func.func @transform_5(%arg0: i32, %arg1: i32) -> (i32, i32) {
    %c0_i32 = arith.constant 0 : i32
    %c0_i32_0 = arith.constant 0 : i32
    %c0_i32_1 = arith.constant 0 : i32
    return %c0_i32, %c0_i32_0 : i32, i32
  }
  func.func @transform_6(%arg0: i32, %arg1: i32) -> (i32, i32, i32) {
    %c0_i32 = arith.constant 0 : i32
    %c0_i32_0 = arith.constant 0 : i32
    %c0_i32_1 = arith.constant 0 : i32
    return %arg0, %c0_i32, %c0_i32_0 : i32, i32, i32
  }
}

</mosaic_0001>

<llo_original>
// kernel: tpu_custom_call.1
$region0: #{tpu_custom_call.1}
  #allocation0 [shape = 'u32[]', space=smem, size = 0x4, offset = 0x4, fixed_abs, tag = 'smem constant byte address 0x4 - core index']
  #allocation1 [shape = 'u32[144,128]{1,0:T(1,128)}', space=vmem, size = 0x12000, scoped, tag = 'internal scratch']
  #allocation2 [shape = 'f32[32,32]{1,0:T(8,128)}', space=vmem, size = 0x4000, scoped, tag = 'scratch operand']
  %s0 = inlined_call_operand.vmem [shape: f32[2,16,32], index: 0, kind: input, shape index: {}]
  %s1 = inlined_call_operand.vmem [shape: bf16[4,32,8], index: 1, kind: input, shape index: {}]
  %s2 = inlined_call_operand.vmem [shape: bf16[4,32,8], index: 2, kind: input, shape index: {}]
  %s3 = inlined_call_operand.vmem [shape: bf16[4,32,8], index: 3, kind: input, shape index: {}]
  %s4 = inlined_call_operand.vmem [shape: bf16[4,8,32], index: 4, kind: input, shape index: {}]
  %s5 = inlined_call_operand.vmem [shape: f32[1,32], index: 5, kind: input, shape index: {}]
  %s6 = inlined_call_operand.hbm [shape: f32[2,16,32], index: 6, kind: output, shape index: {}]
  %s7 = sld [smem:[#allocation0]]
  $region65: #{tpu_custom_call.1} parent=0
    _
  %s9 = ssub.s32 1, %s7
  %s10 = scalar_select 0, %s9, %s7
  $region1: #{tpu_custom_call.1} parent=0
    #allocation3 [shape = 'u8[16384]{0}', space=vmem, size = 0x4000, scoped, tag = 'output window, operand 0, single buffered']
    #allocation4 [shape = 's32[2]{0}', space=sflag, size = 0x8, scoped, tag = 'scoped memory for tpu_custom_call.1']
    %11 = vsyncpa [#allocation4], 0
    loop: start=0, step=1, limit=6
    $region2: #{tpu_custom_call.1} parent=1 // loop_pre_header
      _
    $region3: #{tpu_custom_call.1} parent=1 // loop_header
      %s13 = sphi 0, %s17
      %p14 = scmp.ge.s32.totalorder %s13, 6
      %s20 = sphi 0, %s32
      %s21 = sphi 0, %s28
      %s22 = sphi 0, %s20
      %s23 = sphi 0, %s21
      %s24 = sphi 0, %s22
      %s25 = sphi 0, %s23
      %s35 = sphi 0, %s37
      %s38 = sphi 0, %s35
      %s39 = sphi 0, %s38
      %s55 = sphi 0, %s39
      %s61 = sphi 0, %s63
      %s64 = sphi 0, %s61
      %s65 = sphi 0, %s64
      %s81 = sphi 0, %s65
      %s87 = sphi 0, %s89
      %s90 = sphi 0, %s87
      %s91 = sphi 0, %s90
      %s107 = sphi 0, %s91
      %s113 = sphi 0, %s115
      %s116 = sphi 0, %s113
      %s117 = sphi 0, %s116
      %s133 = sphi 0, %s117
      %s139 = sphi 0, %s141
      %s142 = sphi 0, %s139
      %s143 = sphi 0, %s142
      %s159 = sphi 0, %s143
      %s163 = sphi 0, %s163
      %s165 = sphi 0, %s163
      %s166 = sphi 0, %s165
      %s180 = sphi 0, %s166
      %s186 = sphi 0, %s188
      %s189 = sphi 0, %s186
      %s190 = sphi 0, %s189
      %s206 = sphi 0, %s190
    $region4: #{tpu_custom_call.1} parent=1 // loop_header_branch
      %16 = sbr.rel (%p14) target = $region8
    $region5: #{tpu_custom_call.1} parent=1 // loop_body
      %s18 = ssub.s32 %s13, 1
      %s19 = ssub.s32 %s13, 2
      %s26 = sadd.s32 1, %s21
      %p27 = scmp.ge.s32.totalorder %s26, 4
      %s28 = scalar_select %p27, 0, %s26
      %s29 = sadd.s32 1, %s20
      %s30 = scalar_select %p27, %s29, %s20
      %p31 = scmp.ge.s32.totalorder %s30, 1
      %s32 = scalar_select %p31, 0, %s30
      %s33 = ssub.s32 %s20, %s32
      %p34 = scmp.eq.s32.totalorder %s33, 0
      %s36 = sadd.s32 %s35, 1
      %s37 = scalar_select %p34, %s35, %s36
      %p40 = pneg %p34
      %p41 = scmp.eq.s32.totalorder %s13, 3
      %p42 = por %p40, %p41
      %p43 = scmp.ne.s32.totalorder %s35, %s38
      %p44 = scmp.eq.s32.totalorder %s13, 0
      %p45 = por %p43, %p44
      %p46 = scmp.ne.s32.totalorder %s35, %s38
      %p47 = scmp.eq.s32.totalorder %s18, 3
      %p48 = por %p46, %p47
      %p49 = scmp.ne.s32.totalorder %s38, %s39
      %p50 = scmp.eq.s32.totalorder %s18, 0
      %p51 = por %p49, %p50
      %p52 = scmp.ne.s32.totalorder %s38, %s39
      %p53 = scmp.eq.s32.totalorder %s19, 3
      %p54 = por %p52, %p53
      %p56 = scmp.ne.s32.totalorder %s39, %s55
      %p57 = scmp.eq.s32.totalorder %s19, 0
      %p58 = por %p56, %p57
      %s59 = ssub.s32 %s21, %s28
      %p60 = scmp.eq.s32.totalorder %s59, 0
      %s62 = sadd.s32 %s61, 1
      %s63 = scalar_select %p60, %s61, %s62
      %p66 = pneg %p60
      %p67 = scmp.eq.s32.totalorder %s13, 3
      %p68 = por %p66, %p67
      %p69 = scmp.ne.s32.totalorder %s61, %s64
      %p70 = scmp.eq.s32.totalorder %s13, 0
      %p71 = por %p69, %p70
      %p72 = scmp.ne.s32.totalorder %s61, %s64
      %p73 = scmp.eq.s32.totalorder %s18, 3
      %p74 = por %p72, %p73
      %p75 = scmp.ne.s32.totalorder %s64, %s65
      %p76 = scmp.eq.s32.totalorder %s18, 0
      %p77 = por %p75, %p76
      %p78 = scmp.ne.s32.totalorder %s64, %s65
      %p79 = scmp.eq.s32.totalorder %s19, 3
      %p80 = por %p78, %p79
      %p82 = scmp.ne.s32.totalorder %s65, %s81
      %p83 = scmp.eq.s32.totalorder %s19, 0
      %p84 = por %p82, %p83
      %s85 = ssub.s32 %s21, %s28
      %p86 = scmp.eq.s32.totalorder %s85, 0
      %s88 = sadd.s32 %s87, 1
      %s89 = scalar_select %p86, %s87, %s88
      %p92 = pneg %p86
      %p93 = scmp.eq.s32.totalorder %s13, 3
      %p94 = por %p92, %p93
      %p95 = scmp.ne.s32.totalorder %s87, %s90
      %p96 = scmp.eq.s32.totalorder %s13, 0
      %p97 = por %p95, %p96
      %p98 = scmp.ne.s32.totalorder %s87, %s90
      %p99 = scmp.eq.s32.totalorder %s18, 3
      %p100 = por %p98, %p99
      %p101 = scmp.ne.s32.totalorder %s90, %s91
      %p102 = scmp.eq.s32.totalorder %s18, 0
      %p103 = por %p101, %p102
      %p104 = scmp.ne.s32.totalorder %s90, %s91
      %p105 = scmp.eq.s32.totalorder %s19, 3
      %p106 = por %p104, %p105
      %p108 = scmp.ne.s32.totalorder %s91, %s107
      %p109 = scmp.eq.s32.totalorder %s19, 0
      %p110 = por %p108, %p109
      %s111 = ssub.s32 %s21, %s28
      %p112 = scmp.eq.s32.totalorder %s111, 0
      %s114 = sadd.s32 %s113, 1
      %s115 = scalar_select %p112, %s113, %s114
      %p118 = pneg %p112
      %p119 = scmp.eq.s32.totalorder %s13, 3
      %p120 = por %p118, %p119
      %p121 = scmp.ne.s32.totalorder %s113, %s116
      %p122 = scmp.eq.s32.totalorder %s13, 0
      %p123 = por %p121, %p122
      %p124 = scmp.ne.s32.totalorder %s113, %s116
      %p125 = scmp.eq.s32.totalorder %s18, 3
      %p126 = por %p124, %p125
      %p127 = scmp.ne.s32.totalorder %s116, %s117
      %p128 = scmp.eq.s32.totalorder %s18, 0
      %p129 = por %p127, %p128
      %p130 = scmp.ne.s32.totalorder %s116, %s117
      %p131 = scmp.eq.s32.totalorder %s19, 3
      %p132 = por %p130, %p131
      %p134 = scmp.ne.s32.totalorder %s117, %s133
      %p135 = scmp.eq.s32.totalorder %s19, 0
      %p136 = por %p134, %p135
      %s137 = ssub.s32 %s21, %s28
      %p138 = scmp.eq.s32.totalorder %s137, 0
      %s140 = sadd.s32 %s139, 1
      %s141 = scalar_select %p138, %s139, %s140
      %p144 = pneg %p138
      %p145 = scmp.eq.s32.totalorder %s13, 3
      %p146 = por %p144, %p145
      %p147 = scmp.ne.s32.totalorder %s139, %s142
      %p148 = scmp.eq.s32.totalorder %s13, 0
      %p149 = por %p147, %p148
      %p150 = scmp.ne.s32.totalorder %s139, %s142
      %p151 = scmp.eq.s32.totalorder %s18, 3
      %p152 = por %p150, %p151
      %p153 = scmp.ne.s32.totalorder %s142, %s143
      %p154 = scmp.eq.s32.totalorder %s18, 0
      %p155 = por %p153, %p154
      %p156 = scmp.ne.s32.totalorder %s142, %s143
      %p157 = scmp.eq.s32.totalorder %s19, 3
      %p158 = por %p156, %p157
      %p160 = scmp.ne.s32.totalorder %s143, %s159
      %p161 = scmp.eq.s32.totalorder %s19, 0
      %p162 = por %p160, %p161
      %s164 = sadd.s32 %s163, 1
      %p167 = scmp.eq.s32.totalorder %s13, 3
      %p168 = scmp.ne.s32.totalorder %s163, %s165
      %p169 = scmp.eq.s32.totalorder %s13, 0
      %p170 = por %p168, %p169
      %p171 = scmp.ne.s32.totalorder %s163, %s165
      %p172 = scmp.eq.s32.totalorder %s18, 3
      %p173 = por %p171, %p172
      %p174 = scmp.ne.s32.totalorder %s165, %s166
      %p175 = scmp.eq.s32.totalorder %s18, 0
      %p176 = por %p174, %p175
      %p177 = scmp.ne.s32.totalorder %s165, %s166
      %p178 = scmp.eq.s32.totalorder %s19, 3
      %p179 = por %p177, %p178
      %p181 = scmp.ne.s32.totalorder %s166, %s180
      %p182 = scmp.eq.s32.totalorder %s19, 0
      %p183 = por %p181, %p182
      %s184 = ssub.s32 %s20, %s32
      %p185 = scmp.eq.s32.totalorder %s184, 0
      %s187 = sadd.s32 %s186, 1
      %s188 = scalar_select %p185, %s186, %s187
      %p191 = pneg %p185
      %p192 = scmp.eq.s32.totalorder %s13, 3
      %p193 = por %p191, %p192
      %p194 = scmp.ne.s32.totalorder %s186, %s189
      %p195 = scmp.eq.s32.totalorder %s13, 0
      %p196 = por %p194, %p195
      %p197 = scmp.ne.s32.totalorder %s186, %s189
      %p198 = scmp.eq.s32.totalorder %s18, 3
      %p199 = por %p197, %p198
      %p200 = scmp.ne.s32.totalorder %s189, %s190
      %p201 = scmp.eq.s32.totalorder %s18, 0
      %p202 = por %p200, %p201
      %p203 = scmp.ne.s32.totalorder %s189, %s190
      %p204 = scmp.eq.s32.totalorder %s19, 3
      %p205 = por %p203, %p204
      %p207 = scmp.ne.s32.totalorder %s190, %s206
      %p208 = scmp.eq.s32.totalorder %s19, 0
      %p209 = por %p207, %p208
      %p210 = scmp.le.s32.totalorder 1, %s13
      %p211 = scmp.lt.s32.totalorder %s13, 5
      %p212 = pnand %p210, %p211
      %p213 = pneg %p212
      // Predicated region
      $region9: #{tpu_custom_call.1} parent=5 // pred_check
        _
      $region10: #{tpu_custom_call.1} parent=5 // pred_check_branch
        %215 = sbr.rel (%p212) target = $region12
      $region11: #{tpu_custom_call.1} parent=5 // pred_region
        %s216 = ssub.s32 %s13, 1
        // Predicated region
        $region13: #{tpu_custom_call.1} parent=11 // pred_check
          %p217 = pneg %p51
        $region14: #{tpu_custom_call.1} parent=11 // pred_check_branch
          %219 = sbr.rel (%p217) target = $region16
        $region15: #{tpu_custom_call.1} parent=11 // pred_region
          %s220 = smul.u32 2, %s22
          %p221 = scmp.lt.s32.totalorder %s220, 1
          %s222 = scalar_select %p221, %s220, 1
          %s223 = smul.addr %s222, 2
          %s224 = smul.addr %s223, 8
          %s225 = scalar_lea.vmem %s0, %s224
          %s226 = smul.u32 2, %s22
        $region16: #{tpu_custom_call.1} parent=11 // pred_fallthru
          _
        // Predicated region
        $region17: #{tpu_custom_call.1} parent=11 // pred_check
          %p227 = pneg %p176
        $region18: #{tpu_custom_call.1} parent=11 // pred_check_branch
          %229 = sbr.rel (%p227) target = $region20
        $region19: #{tpu_custom_call.1} parent=11 // pred_region
          _
        $region20: #{tpu_custom_call.1} parent=11 // pred_fallthru
          _
      $region12: #{tpu_custom_call.1} parent=5 // pred_fallthru
        _
      %p230 = scmp.lt.s32.totalorder %s13, 4
      // Predicated region
      $region21: #{tpu_custom_call.1} parent=5 // pred_check
        %p231 = pneg %p230
      $region22: #{tpu_custom_call.1} parent=5 // pred_check_branch
        %233 = sbr.rel (%p231) target = $region24
      $region23: #{tpu_custom_call.1} parent=5 // pred_region
        // Predicated region
        $region25: #{tpu_custom_call.1} parent=23 // pred_check
          %p234 = pneg %p71
        $region26: #{tpu_custom_call.1} parent=23 // pred_check_branch
          %236 = sbr.rel (%p234) target = $region28
        $region27: #{tpu_custom_call.1} parent=23 // pred_region
          %p237 = scmp.lt.s32.totalorder %s21, 3
          %s238 = scalar_select %p237, %s21, 3
          %s239 = smul.addr %s238, 4
          %s240 = smul.addr %s239, 4
          %s241 = scalar_lea.vmem %s1, %s240
        $region28: #{tpu_custom_call.1} parent=23 // pred_fallthru
          _
        // Predicated region
        $region29: #{tpu_custom_call.1} parent=23 // pred_check
          %p242 = pneg %p97
        $region30: #{tpu_custom_call.1} parent=23 // pred_check_branch
          %244 = sbr.rel (%p242) target = $region32
        $region31: #{tpu_custom_call.1} parent=23 // pred_region
          %p245 = scmp.lt.s32.totalorder %s21, 3
          %s246 = scalar_select %p245, %s21, 3
          %s247 = smul.addr %s246, 4
          %s248 = smul.addr %s247, 4
          %s249 = scalar_lea.vmem %s2, %s248
        $region32: #{tpu_custom_call.1} parent=23 // pred_fallthru
          _
        // Predicated region
        $region33: #{tpu_custom_call.1} parent=23 // pred_check
          %p250 = pneg %p123
        $region34: #{tpu_custom_call.1} parent=23 // pred_check_branch
          %252 = sbr.rel (%p250) target = $region36
        $region35: #{tpu_custom_call.1} parent=23 // pred_region
          %p253 = scmp.lt.s32.totalorder %s21, 3
          %s254 = scalar_select %p253, %s21, 3
          %s255 = smul.addr %s254, 4
          %s256 = smul.addr %s255, 4
          %s257 = scalar_lea.vmem %s3, %s256
        $region36: #{tpu_custom_call.1} parent=23 // pred_fallthru
          _
        // Predicated region
        $region37: #{tpu_custom_call.1} parent=23 // pred_check
          %p258 = pneg %p149
        $region38: #{tpu_custom_call.1} parent=23 // pred_check_branch
          %260 = sbr.rel (%p258) target = $region40
        $region39: #{tpu_custom_call.1} parent=23 // pred_region
          %p261 = scmp.lt.s32.totalorder %s21, 3
          %s262 = scalar_select %p261, %s21, 3
          %s263 = smul.addr %s262, 4
          %s264 = scalar_lea.vmem %s4, %s263
        $region40: #{tpu_custom_call.1} parent=23 // pred_fallthru
          _
      $region24: #{tpu_custom_call.1} parent=5 // pred_fallthru
        _
      %p265 = scmp.le.s32.totalorder 1, %s13
      %p266 = scmp.lt.s32.totalorder %s13, 5
      %p267 = pnand %p265, %p266
      %p268 = pneg %p267
      // Predicated region
      $region41: #{tpu_custom_call.1} parent=5 // pred_check
        _
      $region42: #{tpu_custom_call.1} parent=5 // pred_check_branch
        %270 = sbr.rel (%p267) target = $region44
      $region43: #{tpu_custom_call.1} parent=5 // pred_region
        %s271 = ssub.s32 %s13, 1
        %s272 = smul.u32 2, %s22
        %p273 = scmp.lt.s32.totalorder %s272, 1
        %s274 = scalar_select %p273, %s272, 1
        %s275 = smul.addr %s274, 2
        %s276 = smul.addr %s275, 8
        %s277 = scalar_lea.vmem %s0, %s276
        %p278 = pneg %p51
        %p279 = pneg %p48
        %p280 = scmp.lt.s32.totalorder %s23, 3
        %s281 = scalar_select %p280, %s23, 3
        %s282 = smul.addr %s281, 4
        %s283 = smul.addr %s282, 4
        %s284 = scalar_lea.vmem %s1, %s283
        %p285 = pneg %p77
        %p286 = pneg %p74
        %p287 = scmp.lt.s32.totalorder %s23, 3
        %s288 = scalar_select %p287, %s23, 3
        %s289 = smul.addr %s288, 4
        %s290 = smul.addr %s289, 4
        %s291 = scalar_lea.vmem %s2, %s290
        %p292 = pneg %p103
        %p293 = pneg %p100
        %p294 = scmp.lt.s32.totalorder %s23, 3
        %s295 = scalar_select %p294, %s23, 3
        %s296 = smul.addr %s295, 4
        %s297 = smul.addr %s296, 4
        %s298 = scalar_lea.vmem %s3, %s297
        %p299 = pneg %p129
        %p300 = pneg %p126
        %p301 = scmp.lt.s32.totalorder %s23, 3
        %s302 = scalar_select %p301, %s23, 3
        %s303 = smul.addr %s302, 4
        %s304 = scalar_lea.vmem %s4, %s303
        %p305 = pneg %p155
        %p306 = pneg %p152
        %p307 = pneg %p176
        %p308 = pneg %p173
        %p309 = pneg %p202
        %p310 = pneg %p199
        %s311 = smul.u32 2, %s22
        %p312 = scmp.lt.s32.totalorder %s311, 1
        %s313 = scalar_select %p312, %s311, 1
        %s314 = smul.addr %s313, 2
        %s315 = smul.addr %s314, 8
        %s316 = scalar_lea.vmem %s0, %s315
        %s317 = smul.u32 2, %s22
        %p318 = scmp.lt.s32.totalorder %s23, 3
        %s319 = scalar_select %p318, %s23, 3
        %s320 = smul.addr %s319, 4
        %s321 = smul.addr %s320, 4
        %s322 = scalar_lea.vmem %s1, %s321
        %p323 = scmp.lt.s32.totalorder %s23, 3
        %s324 = scalar_select %p323, %s23, 3
        %s325 = smul.addr %s324, 4
        %s326 = smul.addr %s325, 4
        %s327 = scalar_lea.vmem %s2, %s326
        %p328 = scmp.lt.s32.totalorder %s23, 3
        %s329 = scalar_select %p328, %s23, 3
        %s330 = smul.addr %s329, 4
        %s331 = smul.addr %s330, 4
        %s332 = scalar_lea.vmem %s3, %s331
        %p333 = scmp.lt.s32.totalorder %s23, 3
        %s334 = scalar_select %p333, %s23, 3
        %s335 = smul.addr %s334, 4
        %s336 = scalar_lea.vmem %s4, %s335
        %s337 = smul.u32 2, %s22
        %p339 = scmp.eq.s32.totalorder %s23, 0
        // Predicated region
        $region45: #{tpu_custom_call.1} parent=43 // pred_check
          %p340 = pneg %p339
        $region46: #{tpu_custom_call.1} parent=43 // pred_check_branch
          %342 = sbr.rel (%p340) target = $region48
        $region47: #{tpu_custom_call.1} parent=43 // pred_region
          %vm343 = vcmask 261120
          %344 = vst.msk [vmem:[#allocation2] sm:$0xff] %vm343, 0.0
          %345 = vst.msk [vmem:[#allocation2 + $0x8] sm:$0xff] %vm343, 0.0
          %346 = vst.msk [vmem:[#allocation2 + $0x10] sm:$0xff] %vm343, 0.0
          %347 = vst.msk [vmem:[#allocation2 + $0x18] sm:$0xff] %vm343, 0.0
        $region48: #{tpu_custom_call.1} parent=43 // pred_fallthru
          _
        %v348 = vld [vmem:[%s316] sm:$0xff]
        %v349 = vld [vmem:[%s316 + $0x8] sm:$0xff]
        %v350 = vld [vmem:[%s316 + $0x10] sm:$0xff]
        %v351 = vld [vmem:[%s316 + $0x18] sm:$0xff]
        %v352 = vpack.c.bf16 %v349, %v348
        %v353 = vpack.c.bf16 %v351, %v350
        %v354 = vld [vmem:[%s322] sm:$0xf]
        %v355 = vld [vmem:[%s322 + $0x4] sm:$0xf]
        %v356 = vld [vmem:[%s322 + $0x8] sm:$0xf]
        %v357 = vld [vmem:[%s322 + $0xc] sm:$0xf]
        %v362 = vunpack.c.l.b16 %v354
        %v363 = vunpack.c.l.b16 %v355
        %v364 = vunpack.c.l.b16 %v356
        %v365 = vunpack.c.l.b16 %v357
        %v366 = vpack.c.b16 %v363, %v362
        %v367 = vpack.c.b16 %v365, %v364
        %vm370 = vcmask 261120
        %v372 = vsel %vm370, %v352, 0
        %v375 = vsel %vm370, %v353, 0
        %377 = vmatprep.subr.bf16.mxu0 0
        %378 = vmatpush1.bf16.msra.mxu0 0
        %379 = vmatprep.subr.bf16.mxu0 0
        %380 = vmatpush1.bf16.msra.mxu0 0
        %381 = vmatprep.subr.bf16.mxu0 0
        %382 = vmatpush1.bf16.msra.mxu0 0
        %383 = vmatprep.subr.bf16.mxu0 0
        %384 = vmatpush1.bf16.msra.mxu0 0
        %385 = vmatprep.subr.bf16.mxu0 0
        %386 = vmatpush1.bf16.msra.mxu0 0
        %387 = vmatprep.subr.bf16.mxu0 0
        %388 = vmatpush1.bf16.msra.mxu0 0
        %389 = vmatprep.subr.bf16.mxu0 0
        %390 = vmatpush1.bf16.msra.mxu0 %v367
        %391 = vmatprep.subr.bf16.mxu0 0
        %392 = vmatpush1.bf16.msra.mxu0 %v366
        %393 = vmatprep.subr.bf16.mxu0 0
        %394 = vmatpush2.bf16.msra.mxu0 0
        %395 = vmatprep.subr.bf16.mxu0 0
        %396 = vmatpush2.bf16.msra.mxu0 0
        %397 = vmatprep.subr.bf16.mxu0 0
        %398 = vmatpush2.bf16.msra.mxu0 0
        %399 = vmatprep.subr.bf16.mxu0 0
        %400 = vmatpush2.bf16.msra.mxu0 0
        %401 = vmatprep.subr.bf16.mxu0 0
        %402 = vmatpush2.bf16.msra.mxu0 0
        %403 = vmatprep.subr.bf16.mxu0 0
        %404 = vmatpush2.bf16.msra.mxu0 0
        %405 = vmatprep.subr.bf16.mxu0 0
        %406 = vmatpush2.bf16.msra.mxu0 0
        %407 = vmatprep.subr.bf16.mxu0 0
        %408 = vmatpush2.bf16.msra.mxu0 0
        %409 = vmatprep.mubr.bf16.mxu0 0
        %410 = vmatmul.mubr.bf16.gmra.mxu0 %v372
        %v411 = vpop.f32.mrf.mxu0
        %v412 = vadd.f32 0.0, %v411
        %v413 = vpop.f32.mrf.mxu0
        %v414 = vpop.f32.mrf.mxu0
        %v415 = vadd.f32 0.0, %v414
        %v416 = vpop.f32.mrf.mxu0
        %417 = vmatprep.mubr.bf16.mxu0 0
        %418 = vmatmul.mubr.bf16.gmra.mxu0 %v375
        %v419 = vpop.f32.mrf.mxu0
        %v420 = vadd.f32 0.0, %v419
        %v421 = vpop.f32.mrf.mxu0
        %v422 = vpop.f32.mrf.mxu0
        %v423 = vadd.f32 0.0, %v422
        %v424 = vpop.f32.mrf.mxu0
        %425 = vdwg.mxu0
        %v426 = vld [vmem:[%s327] sm:$0xf]
        %v427 = vld [vmem:[%s327 + $0x4] sm:$0xf]
        %v428 = vld [vmem:[%s327 + $0x8] sm:$0xf]
        %v429 = vld [vmem:[%s327 + $0xc] sm:$0xf]
        %v434 = vunpack.c.l.b16 %v426
        %v435 = vunpack.c.l.b16 %v427
        %v436 = vunpack.c.l.b16 %v428
        %v437 = vunpack.c.l.b16 %v429
        %v438 = vpack.c.b16 %v435, %v434
        %v439 = vpack.c.b16 %v437, %v436
        %442 = vmatprep.subr.bf16.mxu0 0
        %443 = vmatpush1.bf16.msra.mxu0 0
        %444 = vmatprep.subr.bf16.mxu0 0
        %445 = vmatpush1.bf16.msra.mxu0 0
        %446 = vmatprep.subr.bf16.mxu0 0
        %447 = vmatpush1.bf16.msra.mxu0 0
        %448 = vmatprep.subr.bf16.mxu0 0
        %449 = vmatpush1.bf16.msra.mxu0 0
        %450 = vmatprep.subr.bf16.mxu0 0
        %451 = vmatpush1.bf16.msra.mxu0 0
        %452 = vmatprep.subr.bf16.mxu0 0
        %453 = vmatpush1.bf16.msra.mxu0 0
        %454 = vmatprep.subr.bf16.mxu0 0
        %455 = vmatpush1.bf16.msra.mxu0 %v439
        %456 = vmatprep.subr.bf16.mxu0 0
        %457 = vmatpush1.bf16.msra.mxu0 %v438
        %458 = vmatprep.subr.bf16.mxu0 0
        %459 = vmatpush2.bf16.msra.mxu0 0
        %460 = vmatprep.subr.bf16.mxu0 0
        %461 = vmatpush2.bf16.msra.mxu0 0
        %462 = vmatprep.subr.bf16.mxu0 0
        %463 = vmatpush2.bf16.msra.mxu0 0
        %464 = vmatprep.subr.bf16.mxu0 0
        %465 = vmatpush2.bf16.msra.mxu0 0
        %466 = vmatprep.subr.bf16.mxu0 0
        %467 = vmatpush2.bf16.msra.mxu0 0
        %468 = vmatprep.subr.bf16.mxu0 0
        %469 = vmatpush2.bf16.msra.mxu0 0
        %470 = vmatprep.subr.bf16.mxu0 0
        %471 = vmatpush2.bf16.msra.mxu0 0
        %472 = vmatprep.subr.bf16.mxu0 0
        %473 = vmatpush2.bf16.msra.mxu0 0
        %474 = vmatprep.mubr.bf16.mxu0 0
        %475 = vmatmul.mubr.bf16.gmra.mxu0 %v372
        %v476 = vpop.f32.mrf.mxu0
        %v477 = vadd.f32 0.0, %v476
        %v478 = vpop.f32.mrf.mxu0
        %v479 = vpop.f32.mrf.mxu0
        %v480 = vadd.f32 0.0, %v479
        %v481 = vpop.f32.mrf.mxu0
        %482 = vmatprep.mubr.bf16.mxu0 0
        %483 = vmatmul.mubr.bf16.gmra.mxu0 %v375
        %v484 = vpop.f32.mrf.mxu0
        %v485 = vadd.f32 0.0, %v484
        %v486 = vpop.f32.mrf.mxu0
        %v487 = vpop.f32.mrf.mxu0
        %v488 = vadd.f32 0.0, %v487
        %v489 = vpop.f32.mrf.mxu0
        %490 = vdwg.mxu0
        %v491 = vld [vmem:[%s332] sm:$0xf]
        %v492 = vld [vmem:[%s332 + $0x4] sm:$0xf]
        %v493 = vld [vmem:[%s332 + $0x8] sm:$0xf]
        %v494 = vld [vmem:[%s332 + $0xc] sm:$0xf]
        %v499 = vunpack.c.l.b16 %v491
        %v500 = vunpack.c.l.b16 %v492
        %v501 = vunpack.c.l.b16 %v493
        %v502 = vunpack.c.l.b16 %v494
        %v503 = vpack.c.b16 %v500, %v499
        %v504 = vpack.c.b16 %v502, %v501
        %507 = vmatprep.subr.bf16.mxu0 0
        %508 = vmatpush1.bf16.msra.mxu0 0
        %509 = vmatprep.subr.bf16.mxu0 0
        %510 = vmatpush1.bf16.msra.mxu0 0
        %511 = vmatprep.subr.bf16.mxu0 0
        %512 = vmatpush1.bf16.msra.mxu0 0
        %513 = vmatprep.subr.bf16.mxu0 0
        %514 = vmatpush1.bf16.msra.mxu0 0
        %515 = vmatprep.subr.bf16.mxu0 0
        %516 = vmatpush1.bf16.msra.mxu0 0
        %517 = vmatprep.subr.bf16.mxu0 0
        %518 = vmatpush1.bf16.msra.mxu0 0
        %519 = vmatprep.subr.bf16.mxu0 0
        %520 = vmatpush1.bf16.msra.mxu0 %v504
        %521 = vmatprep.subr.bf16.mxu0 0
        %522 = vmatpush1.bf16.msra.mxu0 %v503
        %523 = vmatprep.subr.bf16.mxu0 0
        %524 = vmatpush2.bf16.msra.mxu0 0
        %525 = vmatprep.subr.bf16.mxu0 0
        %526 = vmatpush2.bf16.msra.mxu0 0
        %527 = vmatprep.subr.bf16.mxu0 0
        %528 = vmatpush2.bf16.msra.mxu0 0
        %529 = vmatprep.subr.bf16.mxu0 0
        %530 = vmatpush2.bf16.msra.mxu0 0
        %531 = vmatprep.subr.bf16.mxu0 0
        %532 = vmatpush2.bf16.msra.mxu0 0
        %533 = vmatprep.subr.bf16.mxu0 0
        %534 = vmatpush2.bf16.msra.mxu0 0
        %535 = vmatprep.subr.bf16.mxu0 0
        %536 = vmatpush2.bf16.msra.mxu0 0
        %537 = vmatprep.subr.bf16.mxu0 0
        %538 = vmatpush2.bf16.msra.mxu0 0
        %539 = vmatprep.mubr.bf16.mxu0 0
        %540 = vmatmul.mubr.bf16.gmra.mxu0 %v372
        %v541 = vpop.f32.mrf.mxu0
        %v542 = vadd.f32 0.0, %v541
        %v543 = vpop.f32.mrf.mxu0
        %v544 = vpop.f32.mrf.mxu0
        %v545 = vadd.f32 0.0, %v544
        %v546 = vpop.f32.mrf.mxu0
        %547 = vmatprep.mubr.bf16.mxu0 0
        %548 = vmatmul.mubr.bf16.gmra.mxu0 %v375
        %v549 = vpop.f32.mrf.mxu0
        %v550 = vadd.f32 0.0, %v549
        %v551 = vpop.f32.mrf.mxu0
        %v552 = vpop.f32.mrf.mxu0
        %v553 = vadd.f32 0.0, %v552
        %v554 = vpop.f32.mrf.mxu0
        %555 = vdwg.mxu0
        %v556 = vpack.c.bf16 %v415, %v412
        %v557 = vpack.c.bf16 %v423, %v420
        %v558 = vpack.c.bf16 %v480, %v477
        %v559 = vpack.c.bf16 %v488, %v485
        %v560 = vpack.c.bf16 %v545, %v542
        %v561 = vpack.c.bf16 %v553, %v550
        %vm562 = vcmask 64512
        %v564 = vsel %vm562, %v556, 0
        %v567 = vsel %vm562, %v558, 0
        %569 = vmatprep.subr.bf16.mxu0 0
        %570 = vmatpush1.bf16.xpose.msra.mxu0 0
        %571 = vmatprep.subr.bf16.mxu0 0
        %572 = vmatpush1.bf16.xpose.msra.mxu0 0
        %573 = vmatprep.subr.bf16.mxu0 0
        %574 = vmatpush1.bf16.xpose.msra.mxu0 0
        %575 = vmatprep.subr.bf16.mxu0 0
        %576 = vmatpush1.bf16.xpose.msra.mxu0 0
        %577 = vmatprep.subr.bf16.mxu0 0
        %578 = vmatpush1.bf16.xpose.msra.mxu0 0
        %579 = vmatprep.subr.bf16.mxu0 0
        %580 = vmatpush1.bf16.xpose.msra.mxu0 0
        %581 = vmatprep.subr.bf16.mxu0 0
        %582 = vmatpush1.bf16.xpose.msra.mxu0 0
        %583 = vmatprep.subr.bf16.mxu0 0
        %584 = vmatpush1.bf16.xpose.msra.mxu0 %v567
        %585 = vmatprep.subr.bf16.mxu0 0
        %586 = vmatpush2.bf16.xpose.msra.mxu0 0
        %587 = vmatprep.subr.bf16.mxu0 0
        %588 = vmatpush2.bf16.xpose.msra.mxu0 0
        %589 = vmatprep.subr.bf16.mxu0 0
        %590 = vmatpush2.bf16.xpose.msra.mxu0 0
        %591 = vmatprep.subr.bf16.mxu0 0
        %592 = vmatpush2.bf16.xpose.msra.mxu0 0
        %593 = vmatprep.subr.bf16.mxu0 0
        %594 = vmatpush2.bf16.xpose.msra.mxu0 0
        %595 = vmatprep.subr.bf16.mxu0 0
        %596 = vmatpush2.bf16.xpose.msra.mxu0 0
        %597 = vmatprep.subr.bf16.mxu0 0
        %598 = vmatpush2.bf16.xpose.msra.mxu0 0
        %599 = vmatprep.subr.bf16.mxu0 0
        %600 = vmatpush2.bf16.xpose.msra.mxu0 0
        %601 = vmatprep.mubr.bf16.mxu0 0
        %602 = vmatmul.mubr.bf16.gmra.mxu0 %v564
        %v603 = vpop.f32.mrf.mxu0
        %v604 = vadd.f32 0.0, %v603
        %v605 = vpop.f32.mrf.mxu0
        %v606 = vpop.f32.mrf.mxu0
        %v607 = vadd.f32 0.0, %v606
        %v608 = vpop.f32.mrf.mxu0
        %609 = vdwg.mxu0
        %v611 = vsel %vm562, %v557, 0
        %v614 = vsel %vm562, %v559, 0
        %616 = vmatprep.subr.bf16.mxu0 0
        %617 = vmatpush1.bf16.xpose.msra.mxu0 0
        %618 = vmatprep.subr.bf16.mxu0 0
        %619 = vmatpush1.bf16.xpose.msra.mxu0 0
        %620 = vmatprep.subr.bf16.mxu0 0
        %621 = vmatpush1.bf16.xpose.msra.mxu0 0
        %622 = vmatprep.subr.bf16.mxu0 0
        %623 = vmatpush1.bf16.xpose.msra.mxu0 0
        %624 = vmatprep.subr.bf16.mxu0 0
        %625 = vmatpush1.bf16.xpose.msra.mxu0 0
        %626 = vmatprep.subr.bf16.mxu0 0
        %627 = vmatpush1.bf16.xpose.msra.mxu0 0
        %628 = vmatprep.subr.bf16.mxu0 0
        %629 = vmatpush1.bf16.xpose.msra.mxu0 0
        %630 = vmatprep.subr.bf16.mxu0 0
        %631 = vmatpush1.bf16.xpose.msra.mxu0 %v614
        %632 = vmatprep.subr.bf16.mxu0 0
        %633 = vmatpush2.bf16.xpose.msra.mxu0 0
        %634 = vmatprep.subr.bf16.mxu0 0
        %635 = vmatpush2.bf16.xpose.msra.mxu0 0
        %636 = vmatprep.subr.bf16.mxu0 0
        %637 = vmatpush2.bf16.xpose.msra.mxu0 0
        %638 = vmatprep.subr.bf16.mxu0 0
        %639 = vmatpush2.bf16.xpose.msra.mxu0 0
        %640 = vmatprep.subr.bf16.mxu0 0
        %641 = vmatpush2.bf16.xpose.msra.mxu0 0
        %642 = vmatprep.subr.bf16.mxu0 0
        %643 = vmatpush2.bf16.xpose.msra.mxu0 0
        %644 = vmatprep.subr.bf16.mxu0 0
        %645 = vmatpush2.bf16.xpose.msra.mxu0 0
        %646 = vmatprep.subr.bf16.mxu0 0
        %647 = vmatpush2.bf16.xpose.msra.mxu0 0
        %648 = vmatprep.mubr.bf16.mxu0 0
        %649 = vmatmul.mubr.bf16.gmra.mxu0 %v611
        %v650 = vpop.f32.mrf.mxu0
        %v651 = vadd.f32 0.0, %v650
        %v652 = vpop.f32.mrf.mxu0
        %v653 = vpop.f32.mrf.mxu0
        %v654 = vadd.f32 0.0, %v653
        %v655 = vpop.f32.mrf.mxu0
        %656 = vdwg.mxu0
        %vm657 = vcmask 130048
        %v658 = vsel %vm657, %v604, -inf
        %659 = vmax.xlane.f32.xlu0 %v658
        %v660 = vpop.xlane.xlu0 %659
        %v661 = vsel %vm657, %v607, -inf
        %662 = vmax.xlane.f32.xlu0 %v661
        %v663 = vpop.xlane.xlu0 %662
        %v664 = vsel %vm657, %v651, -inf
        %665 = vmax.xlane.f32.xlu0 %v664
        %v666 = vpop.xlane.xlu0 %665
        %v667 = vsel %vm657, %v654, -inf
        %668 = vmax.xlane.f32.xlu0 %v667
        %v669 = vpop.xlane.xlu0 %668
        %v670 = vsub.f32 %v604, %v660
        %v671 = vsub.f32 %v607, %v663
        %v672 = vsub.f32 %v651, %v666
        %v673 = vsub.f32 %v654, %v669
        %v674 = vmul.f32 %v670, 1.442695
        %v675 = vpow.pop %v674
        %v676 = vmul.f32 %v671, 1.442695
        %v677 = vpow.pop %v676
        %v678 = vmul.f32 %v672, 1.442695
        %v679 = vpow.pop %v678
        %v680 = vmul.f32 %v673, 1.442695
        %v681 = vpow.pop %v680
        %v682 = vsel %vm657, %v675, 0.0
        %683 = vadd.xlane.f32.xlu0 %v682
        %v684 = vpop.xlane.xlu0 %683
        %v685 = vsel %vm657, %v677, 0.0
        %686 = vadd.xlane.f32.xlu0 %v685
        %v687 = vpop.xlane.xlu0 %686
        %v688 = vsel %vm657, %v679, 0.0
        %689 = vadd.xlane.f32.xlu0 %v688
        %v690 = vpop.xlane.xlu0 %689
        %v691 = vsel %vm657, %v681, 0.0
        %692 = vadd.xlane.f32.xlu0 %v691
        %v693 = vpop.xlane.xlu0 %692
        %v694 = vrcp.pop %v684
        %v695 = vrcp.pop %v687
        %v696 = vrcp.pop %v690
        %v697 = vrcp.pop %v693
        %v698 = vmul.f32 %v675, %v694
        %v699 = vmul.f32 %v677, %v695
        %v700 = vmul.f32 %v679, %v696
        %v701 = vmul.f32 %v681, %v697
        %v702 = vpack.c.bf16 %v699, %v698
        %v703 = vpack.c.bf16 %v701, %v700
        %v705 = vsel %vm657, %v702, 0
        %707 = vmatprep.subr.bf16.mxu0 0
        %708 = vmatpush1.bf16.msra.mxu0 0
        %709 = vmatprep.subr.bf16.mxu0 0
        %710 = vmatpush1.bf16.msra.mxu0 0
        %711 = vmatprep.subr.bf16.mxu0 0
        %712 = vmatpush1.bf16.msra.mxu0 0
        %713 = vmatprep.subr.bf16.mxu0 0
        %714 = vmatpush1.bf16.msra.mxu0 0
        %715 = vmatprep.subr.bf16.mxu0 0
        %716 = vmatpush1.bf16.msra.mxu0 0
        %717 = vmatprep.subr.bf16.mxu0 0
        %718 = vmatpush1.bf16.msra.mxu0 0
        %719 = vmatprep.subr.bf16.mxu0 0
        %720 = vmatpush1.bf16.msra.mxu0 0
        %721 = vmatprep.subr.bf16.mxu0 0
        %722 = vmatpush1.bf16.msra.mxu0 %v560
        %723 = vmatprep.subr.bf16.mxu0 0
        %724 = vmatpush2.bf16.msra.mxu0 0
        %725 = vmatprep.subr.bf16.mxu0 0
        %726 = vmatpush2.bf16.msra.mxu0 0
        %727 = vmatprep.subr.bf16.mxu0 0
        %728 = vmatpush2.bf16.msra.mxu0 0
        %729 = vmatprep.subr.bf16.mxu0 0
        %730 = vmatpush2.bf16.msra.mxu0 0
        %731 = vmatprep.subr.bf16.mxu0 0
        %732 = vmatpush2.bf16.msra.mxu0 0
        %733 = vmatprep.subr.bf16.mxu0 0
        %734 = vmatpush2.bf16.msra.mxu0 0
        %735 = vmatprep.subr.bf16.mxu0 0
        %736 = vmatpush2.bf16.msra.mxu0 0
        %737 = vmatprep.subr.bf16.mxu0 0
        %738 = vmatpush2.bf16.msra.mxu0 0
        %739 = vmatprep.mubr.bf16.mxu0 0
        %740 = vmatmul.mubr.bf16.gmra.mxu0 %v705
        %v741 = vpop.f32.mrf.mxu0
        %v742 = vadd.f32 0.0, %v741
        %v743 = vpop.f32.mrf.mxu0
        %v744 = vpop.f32.mrf.mxu0
        %v745 = vadd.f32 0.0, %v744
        %v746 = vpop.f32.mrf.mxu0
        %747 = vdwg.mxu0
        %v749 = vsel %vm657, %v703, 0
        %751 = vmatprep.subr.bf16.mxu0 0
        %752 = vmatpush1.bf16.msra.mxu0 0
        %753 = vmatprep.subr.bf16.mxu0 0
        %754 = vmatpush1.bf16.msra.mxu0 0
        %755 = vmatprep.subr.bf16.mxu0 0
        %756 = vmatpush1.bf16.msra.mxu0 0
        %757 = vmatprep.subr.bf16.mxu0 0
        %758 = vmatpush1.bf16.msra.mxu0 0
        %759 = vmatprep.subr.bf16.mxu0 0
        %760 = vmatpush1.bf16.msra.mxu0 0
        %761 = vmatprep.subr.bf16.mxu0 0
        %762 = vmatpush1.bf16.msra.mxu0 0
        %763 = vmatprep.subr.bf16.mxu0 0
        %764 = vmatpush1.bf16.msra.mxu0 0
        %765 = vmatprep.subr.bf16.mxu0 0
        %766 = vmatpush1.bf16.msra.mxu0 %v561
        %767 = vmatprep.subr.bf16.mxu0 0
        %768 = vmatpush2.bf16.msra.mxu0 0
        %769 = vmatprep.subr.bf16.mxu0 0
        %770 = vmatpush2.bf16.msra.mxu0 0
        %771 = vmatprep.subr.bf16.mxu0 0
        %772 = vmatpush2.bf16.msra.mxu0 0
        %773 = vmatprep.subr.bf16.mxu0 0
        %774 = vmatpush2.bf16.msra.mxu0 0
        %775 = vmatprep.subr.bf16.mxu0 0
        %776 = vmatpush2.bf16.msra.mxu0 0
        %777 = vmatprep.subr.bf16.mxu0 0
        %778 = vmatpush2.bf16.msra.mxu0 0
        %779 = vmatprep.subr.bf16.mxu0 0
        %780 = vmatpush2.bf16.msra.mxu0 0
        %781 = vmatprep.subr.bf16.mxu0 0
        %782 = vmatpush2.bf16.msra.mxu0 0
        %783 = vmatprep.mubr.bf16.mxu0 0
        %784 = vmatmul.mubr.bf16.gmra.mxu0 %v749
        %v785 = vpop.f32.mrf.mxu0
        %v786 = vadd.f32 0.0, %v785
        %v787 = vpop.f32.mrf.mxu0
        %v788 = vpop.f32.mrf.mxu0
        %v789 = vadd.f32 0.0, %v788
        %v790 = vpop.f32.mrf.mxu0
        %791 = vdwg.mxu0
        %v792 = vpack.c.bf16 %v745, %v742
        %v793 = vpack.c.bf16 %v789, %v786
        %v794 = vld [vmem:[#allocation2] sm:$0xff]
        %v795 = vld [vmem:[#allocation2 + $0x8] sm:$0xff]
        %v796 = vld [vmem:[#allocation2 + $0x10] sm:$0xff]
        %v797 = vld [vmem:[#allocation2 + $0x18] sm:$0xff]
        %v798 = vld [vmem:[%s336] sm:$0xf]
        %v800 = vsel %vm562, %v792, 0
        %v803 = vsel %vm562, %v793, 0
        %vm805 = vcmask 1043456
        %v807 = vsel %vm805, %v798, 0
        %809 = vmatprep.subr.bf16.mxu0 0
        %810 = vmatpush1.bf16.msra.mxu0 0
        %811 = vmatprep.subr.bf16.mxu0 0
        %812 = vmatpush1.bf16.msra.mxu0 0
        %813 = vmatprep.subr.bf16.mxu0 0
        %814 = vmatpush1.bf16.msra.mxu0 0
        %815 = vmatprep.subr.bf16.mxu0 0
        %816 = vmatpush1.bf16.msra.mxu0 0
        %817 = vmatprep.subr.bf16.mxu0 0
        %818 = vmatpush1.bf16.msra.mxu0 0
        %819 = vmatprep.subr.bf16.mxu0 0
        %820 = vmatpush1.bf16.msra.mxu0 0
        %821 = vmatprep.subr.bf16.mxu0 0
        %822 = vmatpush1.bf16.msra.mxu0 0
        %823 = vmatprep.subr.bf16.mxu0 0
        %824 = vmatpush1.bf16.msra.mxu0 %v807
        %825 = vmatprep.subr.bf16.mxu0 0
        %826 = vmatpush2.bf16.msra.mxu0 0
        %827 = vmatprep.subr.bf16.mxu0 0
        %828 = vmatpush2.bf16.msra.mxu0 0
        %829 = vmatprep.subr.bf16.mxu0 0
        %830 = vmatpush2.bf16.msra.mxu0 0
        %831 = vmatprep.subr.bf16.mxu0 0
        %832 = vmatpush2.bf16.msra.mxu0 0
        %833 = vmatprep.subr.bf16.mxu0 0
        %834 = vmatpush2.bf16.msra.mxu0 0
        %835 = vmatprep.subr.bf16.mxu0 0
        %836 = vmatpush2.bf16.msra.mxu0 0
        %837 = vmatprep.subr.bf16.mxu0 0
        %838 = vmatpush2.bf16.msra.mxu0 0
        %839 = vmatprep.subr.bf16.mxu0 0
        %840 = vmatpush2.bf16.msra.mxu0 0
        %841 = vmatprep.mubr.bf16.mxu0 0
        %842 = vmatmul.mubr.bf16.gmra.mxu0 %v800
        %v843 = vpop.f32.mrf.mxu0
        %v844 = vadd.f32 0.0, %v843
        %v845 = vpop.f32.mrf.mxu0
        %v846 = vpop.f32.mrf.mxu0
        %v847 = vadd.f32 0.0, %v846
        %v848 = vpop.f32.mrf.mxu0
        %849 = vmatprep.mubr.bf16.mxu0 0
        %850 = vmatmul.mubr.bf16.gmra.mxu0 %v803
        %v851 = vpop.f32.mrf.mxu0
        %v852 = vadd.f32 0.0, %v851
        %v853 = vpop.f32.mrf.mxu0
        %v854 = vpop.f32.mrf.mxu0
        %v855 = vadd.f32 0.0, %v854
        %v856 = vpop.f32.mrf.mxu0
        %857 = vdwg.mxu0
        %v858 = vadd.f32 %v794, %v844
        %v859 = vadd.f32 %v795, %v847
        %v860 = vadd.f32 %v796, %v852
        %v861 = vadd.f32 %v797, %v855
        %862 = vst.msk [vmem:[#allocation2] sm:$0xff] %vm370, %v858
        %863 = vst.msk [vmem:[#allocation2 + $0x8] sm:$0xff] %vm370, %v859
        %864 = vst.msk [vmem:[#allocation2 + $0x10] sm:$0xff] %vm370, %v860
        %865 = vst.msk [vmem:[#allocation2 + $0x18] sm:$0xff] %vm370, %v861
        %p866 = scmp.eq.s32.totalorder %s23, 3
        // Predicated region
        $region49: #{tpu_custom_call.1} parent=43 // pred_check
          %p867 = pneg %p866
        $region50: #{tpu_custom_call.1} parent=43 // pred_check_branch
          %869 = sbr.rel (%p867) target = $region52
        $region51: #{tpu_custom_call.1} parent=43 // pred_region
          %v870 = vld [vmem:[#allocation2] sm:$0xff]
          %v871 = vld [vmem:[#allocation2 + $0x8] sm:$0xff]
          %v872 = vld [vmem:[#allocation2 + $0x10] sm:$0xff]
          %v873 = vld [vmem:[#allocation2 + $0x18] sm:$0xff]
          %v874 = vld [vmem:[%s5] sm:$0x1]
          %v876 = vlaneseq
          %v877 = vshrl.u32 %v876, 7
          %v878 = vsub.s32 0, %v877
          %v879 = vrot.slane %v874, %v878
          %v881 = vadd.f32 %v870, %v879
          %v882 = vadd.f32 %v871, %v879
          %v883 = vadd.f32 %v872, %v879
          %v884 = vadd.f32 %v873, %v879
          %885 = vst.msk [vmem:[#allocation3] sm:$0xff] %vm370, %v881
          %886 = vst.msk [vmem:[#allocation3 + $0x8] sm:$0xff] %vm370, %v882
          %887 = vst.msk [vmem:[#allocation3 + $0x10] sm:$0xff] %vm370, %v883
          %888 = vst.msk [vmem:[#allocation3 + $0x18] sm:$0xff] %vm370, %v884
        $region52: #{tpu_custom_call.1} parent=43 // pred_fallthru
          _
        // Predicated region
        $region53: #{tpu_custom_call.1} parent=43 // pred_check
          %p889 = pneg %p199
        $region54: #{tpu_custom_call.1} parent=43 // pred_check_branch
          %891 = sbr.rel (%p889) target = $region56
        $region55: #{tpu_custom_call.1} parent=43 // pred_region
          %s892 = smul.u32 2, %s22
          %s894 = ssub.s32 512, 512
          %895 = vsyncadd [#allocation4], %s894
          %s896 = smul.addr %s892, 2
          %s897 = smul.addr %s896, 128
          %s898 = scalar_lea.hbm %s6, %s897
          %s899 = sshll.u32 [#allocation3], 4
          %s900 = int_to_ptr.vmem [resolvable:$true] %s899
          %905 = dma.vmem_to_hbm [thread:$0]  %s900, 512, %s898, [#allocation4], 128, 128, 8
        $region56: #{tpu_custom_call.1} parent=43 // pred_fallthru
          _
        // Predicated region
        $region57: #{tpu_custom_call.1} parent=43 // pred_check
          %p906 = pneg %p199
        $region58: #{tpu_custom_call.1} parent=43 // pred_check_branch
          %908 = sbr.rel (%p906) target = $region60
        $region59: #{tpu_custom_call.1} parent=43 // pred_region
          %909 = dma.done [#allocation4], 512
        $region60: #{tpu_custom_call.1} parent=43 // pred_fallthru
          _
      $region44: #{tpu_custom_call.1} parent=5 // pred_fallthru
        _
      %p910 = scmp.le.s32.totalorder 2, %s13
      // Predicated region
      $region61: #{tpu_custom_call.1} parent=5 // pred_check
        %p911 = pneg %p910
      $region62: #{tpu_custom_call.1} parent=5 // pred_check_branch
        %913 = sbr.rel (%p911) target = $region64
      $region63: #{tpu_custom_call.1} parent=5 // pred_region
        %s914 = ssub.s32 %s13, 2
      $region64: #{tpu_custom_call.1} parent=5 // pred_fallthru
        _
    $region6: #{tpu_custom_call.1} parent=1 // loop_footer
      %s17 = sadd.s32 1, %s13
    $region7: #{tpu_custom_call.1} parent=1 // loop_footer_branch
      %12 = sbr.rel target = $region3
    $region8: #{tpu_custom_call.1} parent=1 // loop_exit
      _
    %915 = vsyncpa [#allocation4], 1
    %s916 = scalar_lea.sflag [#allocation4], 1
    %917 = vsyncpa %s916, 1

</llo_original>
